<compile_context>
chip_gen: v7x
topology: tpu7x:2x2x1
jax: 0.10.0
libtpu: 0.0.40
codegen_flags: <defaults>
</compile_context>

<pallas_src>
import jax
import jax.numpy as jnp
from jax.experimental import pallas as pl
from jax.experimental.pallas import tpu as pltpu


def _round_up(x, m):
    return (x + m - 1) // m * m


def _latent_mapping_kernel(x_ref, w_ref, add_ref, o_ref):
    # x_ref   : (TM, D_in)   row tile of flattened inputs (bf16 or f32)
    # w_ref   : (Dp, D_in)   weight, PyTorch (out, in) layout, D_out padded to Dp
    # add_ref : (TM, Dp)     f32 pre-folded (bias [+ positional embedding]) rows
    # o_ref   : (TM, Dp)     lane-dense output tile
    y = jax.lax.dot_general(
        x_ref[...], w_ref[...],
        dimension_numbers=(((1,), (1,)), ((), ())),   # contract D_in with D_in
        preferred_element_type=jnp.float32,           # f32 accumulate on MXU
    )
    o_ref[...] = (y + add_ref[...]).astype(o_ref.dtype)  # f32 epilogue


def latent_mapping(xs, weight, bias, pos_emb_latent, use_pe=True,
                   mxu_dtype=jnp.bfloat16):
    """Pallas implementation of LatentMapping.forward.

    xs:             (B, N, D_in) float32
    weight:         (D_out, D_in)   -- PyTorch nn.Linear layout (NOT transposed)
    bias:           (D_out,)
    pos_emb_latent: (1, N, D_out) or None
    """
    B, N, D_in = xs.shape
    D_out = weight.shape[0]
    M = B * N

    # ---- row tiling: big lane/sublane-friendly row blocks, not per-batch ----
    M8 = _round_up(M, 8)
    if M8 >= 512:
        tm = 256                         # plenty of parallel tiles (v7x 2 TCs)
    elif M8 >= 32 and (M8 // 2) % 8 == 0:
        tm = M8 // 2                     # >=2 row tiles -> both TensorCores
    else:
        tm = M8                          # tiny problem: one block covers it all
    M_pad = _round_up(M8, tm)
    n_tiles = M_pad // tm

    # ---- lane-dense output feature dim ----
    Dp = _round_up(D_out, 128)

    # ---- flatten + pad inputs (wrapper-side layout plumbing only) ----
    x2 = xs.reshape(M, D_in)
    if M_pad != M:
        x2 = jnp.pad(x2, ((0, M_pad - M), (0, 0)))
    x2 = x2.astype(mxu_dtype)

    w = weight
    if Dp != D_out:
        w = jnp.pad(w, ((0, Dp - D_out), (0, 0)))
    w = w.astype(mxu_dtype)

    # ---- fold bias (+ PE) into a single f32 add slab, padded to (M_pad, Dp) ----
    bias_row = jnp.pad(bias.astype(jnp.float32), (0, Dp - D_out)).reshape(1, Dp)
    if use_pe and pos_emb_latent is not None:
        pe = pos_emb_latent.reshape(N, D_out).astype(jnp.float32)
        pe = jnp.pad(pe, ((0, 0), (0, Dp - D_out)))
        add = jnp.tile(pe, (B, 1)) + bias_row            # (M, Dp)
    else:
        add = jnp.broadcast_to(bias_row, (M, Dp))        # bias only, no zero PE
    if M_pad != M:
        add = jnp.pad(add, ((0, M_pad - M), (0, 0)))

    flops = 2 * M * D_in * D_out
    bytes_accessed = (x2.size * x2.dtype.itemsize
                      + w.size * w.dtype.itemsize
                      + add.size * 4
                      + M_pad * Dp * jnp.dtype(xs.dtype).itemsize)

    out = pl.pallas_call(
        _latent_mapping_kernel,
        out_shape=jax.ShapeDtypeStruct((M_pad, Dp), xs.dtype),
        grid_spec=pltpu.PrefetchScalarGridSpec(
            num_scalar_prefetch=0,
            grid=(n_tiles,),
            in_specs=[
                pl.BlockSpec((tm, D_in), lambda i: (i, 0)),   # x rows
                pl.BlockSpec((Dp, D_in), lambda i: (0, 0)),   # resident weight
                pl.BlockSpec((tm, Dp), lambda i: (i, 0)),     # bias(+PE) rows
            ],
            out_specs=pl.BlockSpec((tm, Dp), lambda i: (i, 0)),
        ),
        compiler_params=pltpu.CompilerParams(
            dimension_semantics=("parallel",),
            vmem_limit_bytes=32 * 1024 * 1024,
        ),
        cost_estimate=pl.CostEstimate(
            flops=flops, transcendentals=0, bytes_accessed=bytes_accessed),
    )(x2, w, add)

    # strip row / lane padding, restore (B, N, D_out)
    return out[:M, :D_out].reshape(B, N, D_out)


if __name__ == "__main__":
    # Config-equivalent small shapes:
    #   n_patches = 8, latent_dim = 32, input_dim = 32, use_pe = True, type = 'linear'
    B, N, D_in, D_out = 2, 8, 32, 32

    key = jax.random.PRNGKey(0)
    k_x, k_w, k_b, k_pe = jax.random.split(key, 4)

    xs = jax.random.normal(k_x, (B, N, D_in), dtype=jnp.float32)
    weight = jax.random.normal(k_w, (D_out, D_in), dtype=jnp.float32) * 0.02
    bias = jax.random.normal(k_b, (D_out,), dtype=jnp.float32) * 0.02
    pos_emb_latent = jax.random.normal(k_pe, (1, N, D_out), dtype=jnp.float32)

    out = latent_mapping(xs, weight, bias, pos_emb_latent, use_pe=True)
    out = jax.block_until_ready(out)
    assert out.shape == (B, N, D_out)

    # Reference with the same bf16 operand quantization the MXU sees
    # (f32 accumulate), so the comparison stays tight.
    xq = xs.astype(jnp.bfloat16).astype(jnp.float32)
    wq = weight.astype(jnp.bfloat16).astype(jnp.float32)
    ref = jnp.matmul(xq, wq.T, precision=jax.lax.Precision.HIGHEST) + bias + pos_emb_latent
    assert jnp.allclose(out, ref, atol=1e-4, rtol=1e-4), float(jnp.max(jnp.abs(out - ref)))

    # use_pe=False path (no PE stream, bias-only add slab)
    out_nope = jax.block_until_ready(
        latent_mapping(xs, weight, bias, None, use_pe=False))
    ref_nope = jnp.matmul(xq, wq.T, precision=jax.lax.Precision.HIGHEST) + bias
    assert jnp.allclose(out_nope, ref_nope, atol=1e-4, rtol=1e-4)

    print("KERNEL_OK")
</pallas_src>

<mosaic_0001>
module attributes {stable_mosaic.version = 11 : i64} {
  func.func @_latent_mapping_kernel(%arg0: i32, %arg1: memref<16x32xbf16, #tpu.memory_space<vmem>>, %arg2: memref<128x32xbf16, #tpu.memory_space<vmem>>, %arg3: memref<16x128xf32, #tpu.memory_space<vmem>>, %arg4: memref<16x128xf32, #tpu.memory_space<vmem>>) attributes {dimension_semantics = [#tpu.dimension_semantics<parallel>], iteration_bounds = array<i64: 1>, scalar_prefetch = 0 : i64, scratch_operands = 0 : i64, tpu.core_type = #tpu.core_type<tc>, window_params = [{transform_indices = @transform_0, window_bounds = array<i64: 16, 32>}, {pipeline_mode = #tpu.pipeline_mode<synchronous>, transform_indices = @transform_1, window_bounds = array<i64: 128, 32>}, {transform_indices = @transform_2, window_bounds = array<i64: 16, 128>}, {transform_indices = @transform_3, window_bounds = array<i64: 16, 128>}]} {
    %c0 = arith.constant 0 : index
    %c0_0 = arith.constant 0 : index
    %0 = vector.load %arg1[%c0, %c0_0] : memref<16x32xbf16, #tpu.memory_space<vmem>>, vector<16x32xbf16>
    %c0_1 = arith.constant 0 : index
    %c0_2 = arith.constant 0 : index
    %1 = vector.load %arg2[%c0_1, %c0_2] : memref<128x32xbf16, #tpu.memory_space<vmem>>, vector<128x32xbf16>
    %cst = arith.constant dense<0.000000e+00> : vector<16x128xf32>
    %2 = tpu.matmul %0, %1, %cst {dimension_numbers = #tpu.dot_dimension_numbers<[1], [1], [0], [0], [0, 0, 1, 0], [], []>} : vector<16x32xbf16>, vector<128x32xbf16>, vector<16x128xf32> -> vector<16x128xf32>
    %c0_3 = arith.constant 0 : index
    %c0_4 = arith.constant 0 : index
    %3 = vector.load %arg3[%c0_3, %c0_4] : memref<16x128xf32, #tpu.memory_space<vmem>>, vector<16x128xf32>
    %4 = arith.addf %2, %3 : vector<16x128xf32>
    %c0_5 = arith.constant 0 : index
    %c0_6 = arith.constant 0 : index
    %5 = vector.load %arg4[%c0_5, %c0_6] : memref<16x128xf32, #tpu.memory_space<vmem>>, vector<16x128xf32>
    tpu.vector_store %arg4[%c0_5, %c0_6], %4 {strides = array<i32>} : memref<16x128xf32, #tpu.memory_space<vmem>>, vector<16x128xf32>,
    return
  }
  func.func @transform_0(%arg0: i32) -> (i32, i32) {
    %c0_i32 = arith.constant 0 : i32
    %c0_i32_0 = arith.constant 0 : i32
    return %arg0, %c0_i32 : i32, i32
  }
  func.func @transform_1(%arg0: i32) -> (i32, i32) {
    %c0_i32 = arith.constant 0 : i32
    %c0_i32_0 = arith.constant 0 : i32
    %c0_i32_1 = arith.constant 0 : i32
    return %c0_i32, %c0_i32_0 : i32, i32
  }
  func.func @transform_2(%arg0: i32) -> (i32, i32) {
    %c0_i32 = arith.constant 0 : i32
    %c0_i32_0 = arith.constant 0 : i32
    return %arg0, %c0_i32 : i32, i32
  }
  func.func @transform_3(%arg0: i32) -> (i32, i32) {
    %c0_i32 = arith.constant 0 : i32
    %c0_i32_0 = arith.constant 0 : i32
    return %arg0, %c0_i32 : i32, i32
  }
}

</mosaic_0001>

<llo_original>
// kernel: tpu_custom_call.1
$region0: #{tpu_custom_call.1}
  #allocation0 [shape = 'u32[]', space=smem, size = 0x4, offset = 0x4, fixed_abs, tag = 'smem constant byte address 0x4 - core index']
  #allocation1 [shape = 'u32[144,128]{1,0:T(1,128)}', space=vmem, size = 0x12000, scoped, tag = 'internal scratch']
  %s0 = inlined_call_operand.vmem [shape: bf16[16,32], index: 0, kind: input, shape index: {}]
  %s1 = inlined_call_operand.vmem [shape: bf16[128,32], index: 1, kind: input, shape index: {}]
  %s2 = inlined_call_operand.vmem [shape: f32[16,128], index: 2, kind: input, shape index: {}]
  %s3 = inlined_call_operand.hbm [shape: f32[16,128], index: 3, kind: output, shape index: {}]
  %s4 = sld [smem:[#allocation0]]
  $region22: #{tpu_custom_call.1} parent=0
    _
  %s6 = ssub.s32 1, %s4
  %s7 = scalar_select 0, %s6, %s4
  $region1: #{tpu_custom_call.1} parent=0
    #allocation2 [shape = 'u8[8192]{0}', space=vmem, size = 0x2000, scoped, tag = 'output window, operand 0, single buffered']
    #allocation3 [shape = 's32[1]{0}', space=sflag, size = 0x4, scoped, tag = 'scoped memory for tpu_custom_call.1']
    %8 = vsyncpa [#allocation3], 0
    // Predicated region
    $region2: #{tpu_custom_call.1} parent=1 // pred_check
      _
    $region3: #{tpu_custom_call.1} parent=1 // pred_check_branch
      %10 = sbr.rel (0) target = $region5
    $region4: #{tpu_custom_call.1} parent=1 // pred_region
      _
    $region5: #{tpu_custom_call.1} parent=1 // pred_fallthru
      _
    // Predicated region
    $region6: #{tpu_custom_call.1} parent=1 // pred_check
      _
    $region7: #{tpu_custom_call.1} parent=1 // pred_check_branch
      %12 = sbr.rel (0) target = $region9
    $region8: #{tpu_custom_call.1} parent=1 // pred_region
      _
    $region9: #{tpu_custom_call.1} parent=1 // pred_fallthru
      _
    // Predicated region
    $region10: #{tpu_custom_call.1} parent=1 // pred_check
      _
    $region11: #{tpu_custom_call.1} parent=1 // pred_check_branch
      %14 = sbr.rel (0) target = $region13
    $region12: #{tpu_custom_call.1} parent=1 // pred_region
      _
    $region13: #{tpu_custom_call.1} parent=1 // pred_fallthru
      _
    %v16 = vld [vmem:[%s0] sm:$0xf]
    %v17 = vld [vmem:[%s0 + $0x4] sm:$0xf]
    %v18 = vld [vmem:[%s1] sm:$0xf]
    %v19 = vld [vmem:[%s1 + $0x4] sm:$0xf]
    %v20 = vld [vmem:[%s1 + $0x8] sm:$0xf]
    %v21 = vld [vmem:[%s1 + $0xc] sm:$0xf]
    %v22 = vld [vmem:[%s1 + $0x10] sm:$0xf]
    %v23 = vld [vmem:[%s1 + $0x14] sm:$0xf]
    %v24 = vld [vmem:[%s1 + $0x18] sm:$0xf]
    %v25 = vld [vmem:[%s1 + $0x1c] sm:$0xf]
    %v26 = vld [vmem:[%s1 + $0x20] sm:$0xf]
    %v27 = vld [vmem:[%s1 + $0x24] sm:$0xf]
    %v28 = vld [vmem:[%s1 + $0x28] sm:$0xf]
    %v29 = vld [vmem:[%s1 + $0x2c] sm:$0xf]
    %v30 = vld [vmem:[%s1 + $0x30] sm:$0xf]
    %v31 = vld [vmem:[%s1 + $0x34] sm:$0xf]
    %v32 = vld [vmem:[%s1 + $0x38] sm:$0xf]
    %v33 = vld [vmem:[%s1 + $0x3c] sm:$0xf]
    %v34 = vld [vmem:[%s2] sm:$0xff]
    %v35 = vld [vmem:[%s2 + $0x8] sm:$0xff]
    %v38 = vunpack.c.l.b16 %v16
    %v39 = vunpack.c.l.b16 %v17
    %v40 = vpack.c.b16 %v39, %v38
    %v57 = vunpack.c.l.b16 %v18
    %v58 = vunpack.c.l.b16 %v19
    %v59 = vunpack.c.l.b16 %v20
    %v60 = vunpack.c.l.b16 %v21
    %v61 = vunpack.c.l.b16 %v22
    %v62 = vunpack.c.l.b16 %v23
    %v63 = vunpack.c.l.b16 %v24
    %v64 = vunpack.c.l.b16 %v25
    %v65 = vunpack.c.l.b16 %v26
    %v66 = vunpack.c.l.b16 %v27
    %v67 = vunpack.c.l.b16 %v28
    %v68 = vunpack.c.l.b16 %v29
    %v69 = vunpack.c.l.b16 %v30
    %v70 = vunpack.c.l.b16 %v31
    %v71 = vunpack.c.l.b16 %v32
    %v72 = vunpack.c.l.b16 %v33
    %v73 = vpack.c.b16 %v58, %v57
    %v74 = vpack.c.b16 %v60, %v59
    %v75 = vpack.c.b16 %v62, %v61
    %v76 = vpack.c.b16 %v64, %v63
    %v77 = vpack.c.b16 %v66, %v65
    %v78 = vpack.c.b16 %v68, %v67
    %v79 = vpack.c.b16 %v70, %v69
    %v80 = vpack.c.b16 %v72, %v71
    %vm81 = vcmask 261120
    %v83 = vsel %vm81, %v40, 0
    %v86 = vsel %vm81, %v73, 0
    %v89 = vsel %vm81, %v74, 0
    %v92 = vsel %vm81, %v75, 0
    %v95 = vsel %vm81, %v76, 0
    %v98 = vsel %vm81, %v77, 0
    %v101 = vsel %vm81, %v78, 0
    %v104 = vsel %vm81, %v79, 0
    %v107 = vsel %vm81, %v80, 0
    %109 = vmatprep.subr.bf16.mxu0 0
    %110 = vmatpush1.bf16.xpose.msra.mxu0 %v86
    %111 = vmatprep.subr.bf16.mxu0 0
    %112 = vmatpush1.bf16.xpose.msra.mxu0 %v89
    %113 = vmatprep.subr.bf16.mxu0 0
    %114 = vmatpush1.bf16.xpose.msra.mxu0 %v92
    %115 = vmatprep.subr.bf16.mxu0 0
    %116 = vmatpush1.bf16.xpose.msra.mxu0 %v95
    %117 = vmatprep.subr.bf16.mxu0 0
    %118 = vmatpush1.bf16.xpose.msra.mxu0 %v98
    %119 = vmatprep.subr.bf16.mxu0 0
    %120 = vmatpush1.bf16.xpose.msra.mxu0 %v101
    %121 = vmatprep.subr.bf16.mxu0 0
    %122 = vmatpush1.bf16.xpose.msra.mxu0 %v104
    %123 = vmatprep.subr.bf16.mxu0 0
    %124 = vmatpush1.bf16.xpose.msra.mxu0 %v107
    %125 = vmatprep.subr.bf16.mxu0 0
    %126 = vmatpush1.bf16.xpose.msra.mxu0 0
    %127 = vmatprep.subr.bf16.mxu0 0
    %128 = vmatpush1.bf16.xpose.msra.mxu0 0
    %129 = vmatprep.subr.bf16.mxu0 0
    %130 = vmatpush1.bf16.xpose.msra.mxu0 0
    %131 = vmatprep.subr.bf16.mxu0 0
    %132 = vmatpush1.bf16.xpose.msra.mxu0 0
    %133 = vmatprep.subr.bf16.mxu0 0
    %134 = vmatpush1.bf16.xpose.msra.mxu0 0
    %135 = vmatprep.subr.bf16.mxu0 0
    %136 = vmatpush1.bf16.xpose.msra.mxu0 0
    %137 = vmatprep.subr.bf16.mxu0 0
    %138 = vmatpush1.bf16.xpose.msra.mxu0 0
    %139 = vmatprep.subr.bf16.mxu0 0
    %140 = vmatpush1.bf16.xpose.msra.mxu0 0
    %141 = vmatprep.mubr.bf16.mxu0 0
    %142 = vmatmul.mubr.bf16.gmra.mrb[0].mxu0 %v83
    %v143 = vpop.f32.mrb[0].mxu0
    %v144 = vadd.f32 %v34, %v143
    %v145 = vpop.f32.mrb[0].mxu0
    %v146 = vpop.f32.mrb[0].mxu0
    %v147 = vadd.f32 %v35, %v146
    %v148 = vpop.f32.mrb[0].mxu0
    %149 = vdwg.mxu0
    %150 = vst [vmem:[#allocation2] sm:$0xff] %v144
    %151 = vst [vmem:[#allocation2 + $0x8] sm:$0xff] %v147
    // Predicated region
    $region14: #{tpu_custom_call.1} parent=1 // pred_check
      _
    $region15: #{tpu_custom_call.1} parent=1 // pred_check_branch
      %153 = sbr.rel (0) target = $region17
    $region16: #{tpu_custom_call.1} parent=1 // pred_region
      %s155 = ssub.s32 256, 256
      %156 = vsyncadd [#allocation3], %s155
      %s157 = sshll.u32 [#allocation2], 4
      %s158 = int_to_ptr.vmem [resolvable:$true] %s157
      %163 = dma.vmem_to_hbm [thread:$0]  %s158, 256, %s3, [#allocation3], 128, 128, 8
    $region17: #{tpu_custom_call.1} parent=1 // pred_fallthru
      _
    // Predicated region
    $region18: #{tpu_custom_call.1} parent=1 // pred_check
      _
    $region19: #{tpu_custom_call.1} parent=1 // pred_check_branch
      %165 = sbr.rel (0) target = $region21
    $region20: #{tpu_custom_call.1} parent=1 // pred_region
      %166 = dma.done [#allocation3], 256
    $region21: #{tpu_custom_call.1} parent=1 // pred_fallthru
      _
    %167 = vsyncpa [#allocation3], 1

</llo_original>
